<compile_context>
chip_gen: v7x
topology: tpu7x:2x2x1
jax: 0.10.0
libtpu: 0.0.40
codegen_flags: <defaults>
</compile_context>

<pallas_src>
import math
from functools import partial

import jax
import jax.numpy as jnp
from jax.experimental import pallas as pl
from jax.experimental.pallas import tpu as pltpu


def _round_up(x, m):
    return ((x + m - 1) // m) * m


def _make_head_kernel(c_cls, c_reg, c_dir, c_cls8, c_reg8, precision):
    """Build the fused-head kernel closed over static channel offsets."""

    def kernel(x_ref, wT_ref, b_ref, cls_ref, reg_ref, dir_ref):
        # x_ref  : (Cin, tile_n)      NCHW-native spatial tile (lanes = H*W)
        # wT_ref : (Ctot_pad, Cin)    fused [cls|pad|reg|pad|dir|pad] weights
        # b_ref  : (Ctot_pad, 1)      fused biases (f32)
        # One MXU matmul per (batch, spatial-tile) grid step; f32 accumulate.
        fused = jnp.dot(
            wT_ref[...], x_ref[...],
            preferred_element_type=jnp.float32,
            precision=precision,
        )
        fused = fused + b_ref[...]
        # In-kernel split: each head is stored straight to its own HBM output
        # (no wrapper-side channel-slice copies).  Slice starts are 8-sublane
        # aligned because each head's rows were padded to a multiple of 8.
        cls_ref[...] = fused[0:c_cls]
        reg_ref[...] = fused[c_cls8:c_cls8 + c_reg]
        dir_ref[...] = fused[c_cls8 + c_reg8:c_cls8 + c_reg8 + c_dir]

    return kernel


def head_forward(x_nchw, params, *, tile_n=4096, compute_dtype=None,
                 precision=jax.lax.Precision.HIGHEST):
    """Fused PointPillars head (3 parallel 1x1 convs) as one Pallas kernel.

    x_nchw: (B, Cin, H, W).  Returns (cls, reg, dir) predictions in NCHW, f32.
    compute_dtype: optionally jnp.bfloat16 to halve the dominant x-read
      traffic (accumulate + bias stay f32).  Default keeps f32 numerics.
    """
    wc, bc = params["w_cls"], params["b_cls"]
    wr, br = params["w_reg"], params["b_reg"]
    wd, bd = params["w_dir"], params["b_dir"]

    B, Cin, H, W = x_nchw.shape
    Cc, Cr, Cd = wc.shape[1], wr.shape[1], wd.shape[1]
    Cc8, Cr8, Cd8 = (_round_up(c, 8) for c in (Cc, Cr, Cd))
    Ctot_pad = Cc8 + Cr8 + Cd8

    in_dtype = x_nchw.dtype if compute_dtype is None else jnp.dtype(compute_dtype)

    # Fuse the three heads into one weight / bias, each head padded to an
    # 8-sublane boundary (zero rows) so the in-kernel split is aligned.
    wT = jnp.zeros((Ctot_pad, Cin), dtype=in_dtype)
    wT = wT.at[0:Cc].set(wc.T.astype(in_dtype))
    wT = wT.at[Cc8:Cc8 + Cr].set(wr.T.astype(in_dtype))
    wT = wT.at[Cc8 + Cr8:Cc8 + Cr8 + Cd].set(wd.T.astype(in_dtype))
    bias = jnp.zeros((Ctot_pad, 1), dtype=jnp.float32)
    bias = bias.at[0:Cc, 0].set(bc)
    bias = bias.at[Cc8:Cc8 + Cr, 0].set(br)
    bias = bias.at[Cc8 + Cr8:Cc8 + Cr8 + Cd, 0].set(bd)

    # Flatten spatial dims (free view) and tile the lane axis.  No padding /
    # stripping: Pallas handles the ragged last tile.
    HW = H * W
    tile_n = max(128, (int(tile_n) // 128) * 128)       # 128-granular
    tile_n = min(tile_n, _round_up(HW, 128))            # don't exceed one tile
    n_tiles = pl.cdiv(HW, tile_n)

    x_flat = x_nchw.reshape(B, Cin, HW).astype(in_dtype)

    itemsize = jnp.dtype(in_dtype).itemsize
    cost = pl.CostEstimate(
        flops=2 * B * Cin * Ctot_pad * HW,
        transcendentals=0,
        bytes_accessed=B * HW * (Cin * itemsize + (Cc + Cr + Cd) * 4)
        + Ctot_pad * Cin * itemsize,
    )

    kernel = _make_head_kernel(Cc, Cr, Cd, Cc8, Cr8, precision)

    cls_flat, reg_flat, dir_flat = pl.pallas_call(
        kernel,
        out_shape=(
            jax.ShapeDtypeStruct((B, Cc, HW), jnp.float32),
            jax.ShapeDtypeStruct((B, Cr, HW), jnp.float32),
            jax.ShapeDtypeStruct((B, Cd, HW), jnp.float32),
        ),
        grid_spec=pltpu.PrefetchScalarGridSpec(
            num_scalar_prefetch=0,
            grid=(B, n_tiles),
            in_specs=[
                # x tile: batch dim squeezed, (Cin, tile_n) in the kernel.
                pl.BlockSpec((None, Cin, tile_n), lambda b, j: (b, 0, j)),
                # fused weight / bias: resident across the whole grid.
                pl.BlockSpec((Ctot_pad, Cin), lambda b, j: (0, 0)),
                pl.BlockSpec((Ctot_pad, 1), lambda b, j: (0, 0)),
            ],
            out_specs=[
                pl.BlockSpec((None, Cc, tile_n), lambda b, j: (b, 0, j)),
                pl.BlockSpec((None, Cr, tile_n), lambda b, j: (b, 0, j)),
                pl.BlockSpec((None, Cd, tile_n), lambda b, j: (b, 0, j)),
            ],
        ),
        compiler_params=pltpu.CompilerParams(
            dimension_semantics=("parallel", "parallel"),
            vmem_limit_bytes=48 * 1024 * 1024,
        ),
        cost_estimate=cost,
    )(x_flat, wT, bias)

    return (
        cls_flat.reshape(B, Cc, H, W),
        reg_flat.reshape(B, Cr, H, W),
        dir_flat.reshape(B, Cd, H, W),
    )


def init_head_params(key, in_channel, n_anchors, n_classes):
    """Matches Head.__init__: normal(0, 0.01) weights; cls bias = -log((1-p)/p),
    other biases = 0.  1x1 conv weights (C_out, C_in, 1, 1) stored as (C_in, C_out)."""
    c_cls = n_anchors * n_classes
    c_reg = n_anchors * 7
    c_dir = n_anchors * 2
    k1, k2, k3 = jax.random.split(key, 3)

    def w(k, cout):
        return 0.01 * jax.random.normal(k, (in_channel, cout), dtype=jnp.float32)

    prior_prob = 0.01
    bias_init = float(-math.log((1 - prior_prob) / prior_prob))
    return {
        "w_cls": w(k1, c_cls),
        "b_cls": jnp.full((c_cls,), bias_init, dtype=jnp.float32),
        "w_reg": w(k2, c_reg),
        "b_reg": jnp.zeros((c_reg,), dtype=jnp.float32),
        "w_dir": w(k3, c_dir),
        "b_dir": jnp.zeros((c_dir,), dtype=jnp.float32),
    }


def _ref_head(x, params):
    """Plain-JAX reference: 1x1 conv == per-pixel matmul over channels."""
    B, Cin, H, W = x.shape
    x_flat = jnp.transpose(x, (0, 2, 3, 1)).reshape(-1, Cin)

    def one(wk, bk):
        C = params[wk].shape[1]
        y = jnp.dot(x_flat, params[wk],
                    precision=jax.lax.Precision.HIGHEST) + params[bk]
        return jnp.transpose(y.reshape(B, H, W, C), (0, 3, 1, 2))

    return one("w_cls", "b_cls"), one("w_reg", "b_reg"), one("w_dir", "b_dir")


if __name__ == "__main__":
    # Small shapes consistent with the module's forward (real model: 384, 248, 216).
    B, C_IN, H, W = 2, 32, 16, 16
    N_ANCHORS, N_CLASSES = 2, 3

    key = jax.random.PRNGKey(0)
    kx, kp = jax.random.split(key)
    x = jax.random.normal(kx, (B, C_IN, H, W), dtype=jnp.float32)
    params = init_head_params(kp, C_IN, N_ANCHORS, N_CLASSES)

    cls_pred, reg_pred, dir_pred = head_forward(x, params)
    jax.block_until_ready((cls_pred, reg_pred, dir_pred))

    cls_ref, reg_ref, dir_ref = _ref_head(x, params)
    assert cls_pred.shape == (B, N_ANCHORS * N_CLASSES, H, W)
    assert reg_pred.shape == (B, N_ANCHORS * 7, H, W)
    assert dir_pred.shape == (B, N_ANCHORS * 2, H, W)
    assert jnp.allclose(cls_pred, cls_ref, atol=1e-4, rtol=1e-4)
    assert jnp.allclose(reg_pred, reg_ref, atol=1e-4, rtol=1e-4)
    assert jnp.allclose(dir_pred, dir_ref, atol=1e-4, rtol=1e-4)

    # Ragged spatial extent (H*W not a multiple of 128): exercises the
    # partial-last-tile path, now with no wrapper padding / stripping.
    H2, W2 = 10, 13
    x2 = jax.random.normal(jax.random.PRNGKey(1), (B, C_IN, H2, W2), jnp.float32)
    out2 = head_forward(x2, params)
    jax.block_until_ready(out2)
    ref2 = _ref_head(x2, params)
    for got, want in zip(out2, ref2):
        assert got.shape == want.shape
        assert jnp.allclose(got, want, atol=1e-4, rtol=1e-4)

    # Optional bandwidth-saver path: bf16 input/weight, f32 accumulate + bias.
    out_bf16 = head_forward(x, params, compute_dtype=jnp.bfloat16)
    jax.block_until_ready(out_bf16)
    for got, want in zip(out_bf16, (cls_ref, reg_ref, dir_ref)):
        assert got.shape == want.shape
        assert jnp.allclose(got, want, atol=1e-1)

    print("KERNEL_OK")
</pallas_src>

<mosaic_0001>
module attributes {stable_mosaic.version = 11 : i64} {
  func.func @kernel(%arg0: i32, %arg1: i32, %arg2: memref<1x32x256xf32, #tpu.memory_space<vmem>>, %arg3: memref<32x32xf32, #tpu.memory_space<vmem>>, %arg4: memref<32x1xf32, #tpu.memory_space<vmem>>, %arg5: memref<1x6x256xf32, #tpu.memory_space<vmem>>, %arg6: memref<1x14x256xf32, #tpu.memory_space<vmem>>, %arg7: memref<1x4x256xf32, #tpu.memory_space<vmem>>) attributes {dimension_semantics = [#tpu.dimension_semantics<parallel>, #tpu.dimension_semantics<parallel>], iteration_bounds = array<i64: 2, 1>, scalar_prefetch = 0 : i64, scratch_operands = 0 : i64, tpu.core_type = #tpu.core_type<tc>, window_params = [{transform_indices = @transform_0, window_bounds = array<i64: 1, 32, 256>}, {pipeline_mode = #tpu.pipeline_mode<synchronous>, transform_indices = @transform_1, window_bounds = array<i64: 32, 32>}, {pipeline_mode = #tpu.pipeline_mode<synchronous>, transform_indices = @transform_2, window_bounds = array<i64: 32, 1>}, {transform_indices = @transform_3, window_bounds = array<i64: 1, 6, 256>}, {transform_indices = @transform_4, window_bounds = array<i64: 1, 14, 256>}, {transform_indices = @transform_5, window_bounds = array<i64: 1, 4, 256>}]} {
    %c0 = arith.constant 0 : index
    %c0_0 = arith.constant 0 : index
    %0 = vector.load %arg3[%c0, %c0_0] : memref<32x32xf32, #tpu.memory_space<vmem>>, vector<32x32xf32>
    %c0_1 = arith.constant 0 : index
    %c0_2 = arith.constant 0 : index
    %c0_3 = arith.constant 0 : index
    %1 = vector.load %arg2[%c0_1, %c0_2, %c0_3] : memref<1x32x256xf32, #tpu.memory_space<vmem>>, vector<1x32x256xf32>
    %2 = vector.shape_cast %1 : vector<1x32x256xf32> to vector<32x256xf32>
    %cst = arith.constant dense<0.000000e+00> : vector<32x256xf32>
    %3 = tpu.matmul %0, %2, %cst {dimension_numbers = #tpu.dot_dimension_numbers<[1], [0], [0], [1], [0, 0, 1, 1], [], []>, precision = #tpu.contract_precision<fp32>} : vector<32x32xf32>, vector<32x256xf32>, vector<32x256xf32> -> vector<32x256xf32>
    %c0_4 = arith.constant 0 : index
    %c0_5 = arith.constant 0 : index
    %4 = vector.load %arg4[%c0_4, %c0_5] : memref<32x1xf32, #tpu.memory_space<vmem>>, vector<32x1xf32>
    %5 = vector.broadcast %4 : vector<32x1xf32> to vector<32x256xf32>
    %6 = arith.addf %3, %5 : vector<32x256xf32>
    %7 = vector.extract_strided_slice %6 {offsets = [0, 0], sizes = [6, 256], strides = [1, 1]} : vector<32x256xf32> to vector<6x256xf32>
    %c0_6 = arith.constant 0 : index
    %c0_7 = arith.constant 0 : index
    %c0_8 = arith.constant 0 : index
    %8 = vector.load %arg5[%c0_6, %c0_7, %c0_8] : memref<1x6x256xf32, #tpu.memory_space<vmem>>, vector<1x6x256xf32>
    %9 = vector.shape_cast %8 : vector<1x6x256xf32> to vector<6x256xf32>
    %10 = vector.shape_cast %7 : vector<6x256xf32> to vector<1x6x256xf32>
    tpu.vector_store %arg5[%c0_6, %c0_7, %c0_8], %10 {strides = array<i32>} : memref<1x6x256xf32, #tpu.memory_space<vmem>>, vector<1x6x256xf32>,
    %11 = vector.extract_strided_slice %6 {offsets = [8, 0], sizes = [14, 256], strides = [1, 1]} : vector<32x256xf32> to vector<14x256xf32>
    %c0_9 = arith.constant 0 : index
    %c0_10 = arith.constant 0 : index
    %c0_11 = arith.constant 0 : index
    %12 = vector.load %arg6[%c0_9, %c0_10, %c0_11] : memref<1x14x256xf32, #tpu.memory_space<vmem>>, vector<1x14x256xf32>
    %13 = vector.shape_cast %12 : vector<1x14x256xf32> to vector<14x256xf32>
    %14 = vector.shape_cast %11 : vector<14x256xf32> to vector<1x14x256xf32>
    tpu.vector_store %arg6[%c0_9, %c0_10, %c0_11], %14 {strides = array<i32>} : memref<1x14x256xf32, #tpu.memory_space<vmem>>, vector<1x14x256xf32>,
    %15 = vector.extract_strided_slice %6 {offsets = [24, 0], sizes = [4, 256], strides = [1, 1]} : vector<32x256xf32> to vector<4x256xf32>
    %c0_12 = arith.constant 0 : index
    %c0_13 = arith.constant 0 : index
    %c0_14 = arith.constant 0 : index
    %16 = vector.load %arg7[%c0_12, %c0_13, %c0_14] : memref<1x4x256xf32, #tpu.memory_space<vmem>>, vector<1x4x256xf32>
    %17 = vector.shape_cast %16 : vector<1x4x256xf32> to vector<4x256xf32>
    %18 = vector.shape_cast %15 : vector<4x256xf32> to vector<1x4x256xf32>
    tpu.vector_store %arg7[%c0_12, %c0_13, %c0_14], %18 {strides = array<i32>} : memref<1x4x256xf32, #tpu.memory_space<vmem>>, vector<1x4x256xf32>,
    return
  }
  func.func @transform_0(%arg0: i32, %arg1: i32) -> (i32, i32, i32) {
    %c0_i32 = arith.constant 0 : i32
    %c0_i32_0 = arith.constant 0 : i32
    return %arg0, %c0_i32, %arg1 : i32, i32, i32
  }
  func.func @transform_1(%arg0: i32, %arg1: i32) -> (i32, i32) {
    %c0_i32 = arith.constant 0 : i32
    %c0_i32_0 = arith.constant 0 : i32
    %c0_i32_1 = arith.constant 0 : i32
    return %c0_i32, %c0_i32_0 : i32, i32
  }
  func.func @transform_2(%arg0: i32, %arg1: i32) -> (i32, i32) {
    %c0_i32 = arith.constant 0 : i32
    %c0_i32_0 = arith.constant 0 : i32
    %c0_i32_1 = arith.constant 0 : i32
    return %c0_i32, %c0_i32_0 : i32, i32
  }
  func.func @transform_3(%arg0: i32, %arg1: i32) -> (i32, i32, i32) {
    %c0_i32 = arith.constant 0 : i32
    %c0_i32_0 = arith.constant 0 : i32
    return %arg0, %c0_i32, %arg1 : i32, i32, i32
  }
  func.func @transform_4(%arg0: i32, %arg1: i32) -> (i32, i32, i32) {
    %c0_i32 = arith.constant 0 : i32
    %c0_i32_0 = arith.constant 0 : i32
    return %arg0, %c0_i32, %arg1 : i32, i32, i32
  }
  func.func @transform_5(%arg0: i32, %arg1: i32) -> (i32, i32, i32) {
    %c0_i32 = arith.constant 0 : i32
    %c0_i32_0 = arith.constant 0 : i32
    return %arg0, %c0_i32, %arg1 : i32, i32, i32
  }
}

</mosaic_0001>

<llo_original>
// kernel: tpu_custom_call.1
$region0: #{tpu_custom_call.1}
  #allocation0 [shape = 'u32[]', space=smem, size = 0x4, offset = 0x4, fixed_abs, tag = 'smem constant byte address 0x4 - core index']
  #allocation1 [shape = 'u32[144,128]{1,0:T(1,128)}', space=vmem, size = 0x12000, scoped, tag = 'internal scratch']
  %s0 = inlined_call_operand.hbm [shape: f32[2,32,256], index: 0, kind: input, shape index: {}]
  %s1 = inlined_call_operand.vmem [shape: f32[32,32], index: 1, kind: input, shape index: {}]
  %s2 = inlined_call_operand.vmem [shape: f32[32,1], index: 2, kind: input, shape index: {}]
  %s3 = inlined_call_operand.vmem [shape: f32[2,6,256], index: 3, kind: output, shape index: {0}]
  %s4 = inlined_call_operand.vmem [shape: f32[2,14,256], index: 4, kind: output, shape index: {1}]
  %s5 = inlined_call_operand.hbm [shape: f32[2,4,256], index: 5, kind: output, shape index: {2}]
  %6 = xla_tuple %s3, %s4, %s5
  %s7 = sld [smem:[#allocation0]]
  $region65: #{tpu_custom_call.1} parent=0
    _
  %s9 = ssub.s32 1, %s7
  %s10 = scalar_select 0, %s9, %s7
  $region1: #{tpu_custom_call.1} parent=0
    #allocation2 [shape = 'u8[65536]{0}', space=vmem, size = 0x10000, scoped, tag = 'input window, operand 0']
    #allocation3 [shape = 's32[2]{0}', space=sflag, size = 0x8, scoped, tag = 'scoped memory for tpu_custom_call.1']
    #allocation4 [shape = 's32[2]{0}', space=sflag, size = 0x8, scoped, tag = 'scoped memory for tpu_custom_call.1']
    #allocation5 [shape = 'u8[8192]{0}', space=vmem, size = 0x2000, scoped, tag = 'output window, operand 2']
    %11 = vsyncpa [#allocation3], 0
    %s12 = scalar_lea.sflag [#allocation3], 1
    %13 = vsyncpa %s12, 0
    %14 = vsyncpa [#allocation4], 0
    %s15 = scalar_lea.sflag [#allocation4], 1
    %16 = vsyncpa %s15, 0
    loop: start=0, step=1, limit=4
    $region2: #{tpu_custom_call.1} parent=1 // loop_pre_header
      _
    $region3: #{tpu_custom_call.1} parent=1 // loop_header
      %s18 = sphi 0, %s22
      %p19 = scmp.ge.s32.totalorder %s18, 4
      %s25 = sphi 0, %s37
      %s26 = sphi 0, %s33
      %s27 = sphi 0, %s25
      %s28 = sphi 0, %s26
      %s29 = sphi 0, %s27
      %s30 = sphi 0, %s28
      %s42 = sphi 0, %s44
      %s45 = sphi 0, %s42
      %s46 = sphi 0, %s45
      %s62 = sphi 0, %s46
      %s66 = sphi 0, %s66
      %s68 = sphi 0, %s66
      %s69 = sphi 0, %s68
      %s83 = sphi 0, %s69
      %s87 = sphi 0, %s87
      %s89 = sphi 0, %s87
      %s90 = sphi 0, %s89
      %s104 = sphi 0, %s90
      %s112 = sphi 0, %s114
      %s115 = sphi 0, %s112
      %s116 = sphi 0, %s115
      %s132 = sphi 0, %s116
      %s140 = sphi 0, %s142
      %s143 = sphi 0, %s140
      %s144 = sphi 0, %s143
      %s160 = sphi 0, %s144
      %s168 = sphi 0, %s170
      %s171 = sphi 0, %s168
      %s172 = sphi 0, %s171
      %s188 = sphi 0, %s172
    $region4: #{tpu_custom_call.1} parent=1 // loop_header_branch
      %21 = sbr.rel (%p19) target = $region8
    $region5: #{tpu_custom_call.1} parent=1 // loop_body
      %s23 = ssub.s32 %s18, 1
      %s24 = ssub.s32 %s18, 2
      %s31 = sadd.s32 1, %s26
      %p32 = scmp.ge.s32.totalorder %s31, 1
      %s33 = scalar_select %p32, 0, %s31
      %s34 = sadd.s32 1, %s25
      %s35 = scalar_select %p32, %s34, %s25
      %p36 = scmp.ge.s32.totalorder %s35, 2
      %s37 = scalar_select %p36, 0, %s35
      %s38 = ssub.s32 %s25, %s37
      %s39 = ssub.s32 %s26, %s33
      %s40 = sor.u32 %s38, %s39
      %p41 = scmp.eq.s32.totalorder %s40, 0
      %s43 = sadd.s32 %s42, 1
      %s44 = scalar_select %p41, %s42, %s43
      %p47 = pneg %p41
      %p48 = scmp.eq.s32.totalorder %s18, 1
      %p49 = por %p47, %p48
      %p50 = scmp.ne.s32.totalorder %s42, %s45
      %p51 = scmp.eq.s32.totalorder %s18, 0
      %p52 = por %p50, %p51
      %p53 = scmp.ne.s32.totalorder %s42, %s45
      %p54 = scmp.eq.s32.totalorder %s23, 1
      %p55 = por %p53, %p54
      %p56 = scmp.ne.s32.totalorder %s45, %s46
      %p57 = scmp.eq.s32.totalorder %s23, 0
      %p58 = por %p56, %p57
      %p59 = scmp.ne.s32.totalorder %s45, %s46
      %p60 = scmp.eq.s32.totalorder %s24, 1
      %p61 = por %p59, %p60
      %p63 = scmp.ne.s32.totalorder %s46, %s62
      %p64 = scmp.eq.s32.totalorder %s24, 0
      %p65 = por %p63, %p64
      %s67 = sadd.s32 %s66, 1
      %p70 = scmp.eq.s32.totalorder %s18, 1
      %p71 = scmp.ne.s32.totalorder %s66, %s68
      %p72 = scmp.eq.s32.totalorder %s18, 0
      %p73 = por %p71, %p72
      %p74 = scmp.ne.s32.totalorder %s66, %s68
      %p75 = scmp.eq.s32.totalorder %s23, 1
      %p76 = por %p74, %p75
      %p77 = scmp.ne.s32.totalorder %s68, %s69
      %p78 = scmp.eq.s32.totalorder %s23, 0
      %p79 = por %p77, %p78
      %p80 = scmp.ne.s32.totalorder %s68, %s69
      %p81 = scmp.eq.s32.totalorder %s24, 1
      %p82 = por %p80, %p81
      %p84 = scmp.ne.s32.totalorder %s69, %s83
      %p85 = scmp.eq.s32.totalorder %s24, 0
      %p86 = por %p84, %p85
      %s88 = sadd.s32 %s87, 1
      %p91 = scmp.eq.s32.totalorder %s18, 1
      %p92 = scmp.ne.s32.totalorder %s87, %s89
      %p93 = scmp.eq.s32.totalorder %s18, 0
      %p94 = por %p92, %p93
      %p95 = scmp.ne.s32.totalorder %s87, %s89
      %p96 = scmp.eq.s32.totalorder %s23, 1
      %p97 = por %p95, %p96
      %p98 = scmp.ne.s32.totalorder %s89, %s90
      %p99 = scmp.eq.s32.totalorder %s23, 0
      %p100 = por %p98, %p99
      %p101 = scmp.ne.s32.totalorder %s89, %s90
      %p102 = scmp.eq.s32.totalorder %s24, 1
      %p103 = por %p101, %p102
      %p105 = scmp.ne.s32.totalorder %s90, %s104
      %p106 = scmp.eq.s32.totalorder %s24, 0
      %p107 = por %p105, %p106
      %s108 = ssub.s32 %s25, %s37
      %s109 = ssub.s32 %s26, %s33
      %s110 = sor.u32 %s108, %s109
      %p111 = scmp.eq.s32.totalorder %s110, 0
      %s113 = sadd.s32 %s112, 1
      %s114 = scalar_select %p111, %s112, %s113
      %p117 = pneg %p111
      %p118 = scmp.eq.s32.totalorder %s18, 1
      %p119 = por %p117, %p118
      %p120 = scmp.ne.s32.totalorder %s112, %s115
      %p121 = scmp.eq.s32.totalorder %s18, 0
      %p122 = por %p120, %p121
      %p123 = scmp.ne.s32.totalorder %s112, %s115
      %p124 = scmp.eq.s32.totalorder %s23, 1
      %p125 = por %p123, %p124
      %p126 = scmp.ne.s32.totalorder %s115, %s116
      %p127 = scmp.eq.s32.totalorder %s23, 0
      %p128 = por %p126, %p127
      %p129 = scmp.ne.s32.totalorder %s115, %s116
      %p130 = scmp.eq.s32.totalorder %s24, 1
      %p131 = por %p129, %p130
      %p133 = scmp.ne.s32.totalorder %s116, %s132
      %p134 = scmp.eq.s32.totalorder %s24, 0
      %p135 = por %p133, %p134
      %s136 = ssub.s32 %s25, %s37
      %s137 = ssub.s32 %s26, %s33
      %s138 = sor.u32 %s136, %s137
      %p139 = scmp.eq.s32.totalorder %s138, 0
      %s141 = sadd.s32 %s140, 1
      %s142 = scalar_select %p139, %s140, %s141
      %p145 = pneg %p139
      %p146 = scmp.eq.s32.totalorder %s18, 1
      %p147 = por %p145, %p146
      %p148 = scmp.ne.s32.totalorder %s140, %s143
      %p149 = scmp.eq.s32.totalorder %s18, 0
      %p150 = por %p148, %p149
      %p151 = scmp.ne.s32.totalorder %s140, %s143
      %p152 = scmp.eq.s32.totalorder %s23, 1
      %p153 = por %p151, %p152
      %p154 = scmp.ne.s32.totalorder %s143, %s144
      %p155 = scmp.eq.s32.totalorder %s23, 0
      %p156 = por %p154, %p155
      %p157 = scmp.ne.s32.totalorder %s143, %s144
      %p158 = scmp.eq.s32.totalorder %s24, 1
      %p159 = por %p157, %p158
      %p161 = scmp.ne.s32.totalorder %s144, %s160
      %p162 = scmp.eq.s32.totalorder %s24, 0
      %p163 = por %p161, %p162
      %s164 = ssub.s32 %s25, %s37
      %s165 = ssub.s32 %s26, %s33
      %s166 = sor.u32 %s164, %s165
      %p167 = scmp.eq.s32.totalorder %s166, 0
      %s169 = sadd.s32 %s168, 1
      %s170 = scalar_select %p167, %s168, %s169
      %p173 = pneg %p167
      %p174 = scmp.eq.s32.totalorder %s18, 1
      %p175 = por %p173, %p174
      %p176 = scmp.ne.s32.totalorder %s168, %s171
      %p177 = scmp.eq.s32.totalorder %s18, 0
      %p178 = por %p176, %p177
      %p179 = scmp.ne.s32.totalorder %s168, %s171
      %p180 = scmp.eq.s32.totalorder %s23, 1
      %p181 = por %p179, %p180
      %p182 = scmp.ne.s32.totalorder %s171, %s172
      %p183 = scmp.eq.s32.totalorder %s23, 0
      %p184 = por %p182, %p183
      %p185 = scmp.ne.s32.totalorder %s171, %s172
      %p186 = scmp.eq.s32.totalorder %s24, 1
      %p187 = por %p185, %p186
      %p189 = scmp.ne.s32.totalorder %s172, %s188
      %p190 = scmp.eq.s32.totalorder %s24, 0
      %p191 = por %p189, %p190
      %p192 = scmp.le.s32.totalorder 1, %s18
      %p193 = scmp.lt.s32.totalorder %s18, 3
      %p194 = pnand %p192, %p193
      %p195 = pneg %p194
      // Predicated region
      $region9: #{tpu_custom_call.1} parent=5 // pred_check
        _
      $region10: #{tpu_custom_call.1} parent=5 // pred_check_branch
        %197 = sbr.rel (%p194) target = $region12
      $region11: #{tpu_custom_call.1} parent=5 // pred_region
        %s198 = ssub.s32 %s18, 1
        // Predicated region
        $region13: #{tpu_custom_call.1} parent=11 // pred_check
          %p199 = pneg %p79
        $region14: #{tpu_custom_call.1} parent=11 // pred_check_branch
          %201 = sbr.rel (%p199) target = $region16
        $region15: #{tpu_custom_call.1} parent=11 // pred_region
          _
        $region16: #{tpu_custom_call.1} parent=11 // pred_fallthru
          _
        // Predicated region
        $region17: #{tpu_custom_call.1} parent=11 // pred_check
          %p202 = pneg %p100
        $region18: #{tpu_custom_call.1} parent=11 // pred_check_branch
          %204 = sbr.rel (%p202) target = $region20
        $region19: #{tpu_custom_call.1} parent=11 // pred_region
          _
        $region20: #{tpu_custom_call.1} parent=11 // pred_fallthru
          _
      $region12: #{tpu_custom_call.1} parent=5 // pred_fallthru
        _
      %p205 = scmp.lt.s32.totalorder %s18, 2
      // Predicated region
      $region21: #{tpu_custom_call.1} parent=5 // pred_check
        %p206 = pneg %p205
      $region22: #{tpu_custom_call.1} parent=5 // pred_check_branch
        %208 = sbr.rel (%p206) target = $region24
      $region23: #{tpu_custom_call.1} parent=5 // pred_region
        // Predicated region
        $region25: #{tpu_custom_call.1} parent=23 // pred_check
          %p209 = pneg %p52
        $region26: #{tpu_custom_call.1} parent=23 // pred_check_branch
          %211 = sbr.rel (%p209) target = $region28
        $region27: #{tpu_custom_call.1} parent=23 // pred_region
          %s212 = sand.u32 %s42, 1
          %s213 = scalar_lea.sflag [#allocation3], %s212
          %s214 = sand.u32 %s42, 1
          %s215 = smul.addr %s214, 64
          %s216 = scalar_lea.vmem [#allocation2], %s215
          %s217 = smul.u32 2, %s26
          %s219 = ssub.s32 1024, 1024
          %220 = vsyncadd %s213, %s219
          %s221 = smul.addr %s25, 8
          %s222 = sadd.s32 %s217, %s221
          %s223 = smul.addr %s222, 128
          %s224 = scalar_lea.hbm %s0, %s223
          %s225 = sshll.u32 %s216, 4
          %s226 = int_to_ptr.vmem [resolvable:$true] %s225
          %231 = dma.hbm_to_vmem [thread:$0]  %s224, 1024, %s226, %s213, 256, 256, 16
        $region28: #{tpu_custom_call.1} parent=23 // pred_fallthru
          _
      $region24: #{tpu_custom_call.1} parent=5 // pred_fallthru
        _
      %p232 = scmp.le.s32.totalorder 1, %s18
      %p233 = scmp.lt.s32.totalorder %s18, 3
      %p234 = pnand %p232, %p233
      %p235 = pneg %p234
      // Predicated region
      $region29: #{tpu_custom_call.1} parent=5 // pred_check
        _
      $region30: #{tpu_custom_call.1} parent=5 // pred_check_branch
        %237 = sbr.rel (%p234) target = $region32
      $region31: #{tpu_custom_call.1} parent=5 // pred_region
        %s238 = ssub.s32 %s18, 1
        %s239 = sand.u32 %s45, 1
        %s240 = scalar_lea.sflag [#allocation3], %s239
        %s241 = sand.u32 %s45, 1
        %s242 = smul.addr %s241, 64
        %s243 = scalar_lea.vmem [#allocation2], %s242
        // Predicated region
        $region33: #{tpu_custom_call.1} parent=31 // pred_check
          %p244 = pneg %p58
        $region34: #{tpu_custom_call.1} parent=31 // pred_check_branch
          %246 = sbr.rel (%p244) target = $region36
        $region35: #{tpu_custom_call.1} parent=31 // pred_region
          %247 = dma.done %s240, 1024
        $region36: #{tpu_custom_call.1} parent=31 // pred_fallthru
          _
        %s248 = sand.u32 %s45, 1
        %s249 = scalar_lea.sflag [#allocation3], %s248
        %s250 = sand.u32 %s45, 1
        %s251 = smul.addr %s250, 64
        %s252 = scalar_lea.vmem [#allocation2], %s251
        %p253 = pneg %p58
        %p254 = pneg %p55
        %p255 = pneg %p79
        %p256 = pneg %p76
        %p257 = pneg %p100
        %p258 = pneg %p97
        %p259 = pneg %p128
        %p260 = pneg %p125
        %s261 = smul.u32 2, %s28
        %p262 = scmp.lt.s32.totalorder %s27, 1
        %s263 = scalar_select %p262, %s27, 1
        %p264 = scmp.lt.s32.totalorder %s261, 1
        %s265 = scalar_select %p264, %s261, 1
        %s266 = smul.addr %s263, 2
        %s267 = sadd.s32 %s265, %s266
        %s268 = smul.addr %s267, 8
        %s269 = scalar_lea.vmem %s3, %s268
        %p270 = pneg %p156
        %p271 = pneg %p153
        %s272 = smul.u32 2, %s28
        %p273 = scmp.lt.s32.totalorder %s27, 1
        %s274 = scalar_select %p273, %s27, 1
        %p275 = scmp.lt.s32.totalorder %s272, 1
        %s276 = scalar_select %p275, %s272, 1
        %s277 = smul.addr %s274, 4
        %s278 = sadd.s32 %s276, %s277
        %s279 = smul.addr %s278, 8
        %s280 = scalar_lea.vmem %s4, %s279
        %p281 = pneg %p184
        %p282 = pneg %p181
        %s283 = sand.u32 %s171, 1
        %s284 = scalar_lea.sflag [#allocation4], %s283
        %s285 = sand.u32 %s171, 1
        %s286 = smul.addr %s285, 8
        %s287 = scalar_lea.vmem [#allocation5], %s286
        %s288 = smul.u32 2, %s28
        %s289 = smul.u32 2, %s28
        %p290 = scmp.lt.s32.totalorder %s27, 1
        %s291 = scalar_select %p290, %s27, 1
        %p292 = scmp.lt.s32.totalorder %s289, 1
        %s293 = scalar_select %p292, %s289, 1
        %s294 = smul.addr %s291, 2
        %s295 = sadd.s32 %s293, %s294
        %s296 = smul.addr %s295, 8
        %s297 = scalar_lea.vmem %s3, %s296
        %s298 = smul.u32 2, %s28
        %s299 = smul.u32 2, %s28
        %p300 = scmp.lt.s32.totalorder %s27, 1
        %s301 = scalar_select %p300, %s27, 1
        %p302 = scmp.lt.s32.totalorder %s299, 1
        %s303 = scalar_select %p302, %s299, 1
        %s304 = smul.addr %s301, 4
        %s305 = sadd.s32 %s303, %s304
        %s306 = smul.addr %s305, 8
        %s307 = scalar_lea.vmem %s4, %s306
        %s308 = smul.u32 2, %s28
        %s309 = smul.u32 2, %s28
        %v310 = vld [vmem:[%s1] sm:$0xff]
        %v311 = vld [vmem:[%s1 + $0x8] sm:$0xff]
        %v312 = vld [vmem:[%s1 + $0x10] sm:$0xff]
        %v313 = vld [vmem:[%s1 + $0x18] sm:$0xff]
        %v314 = vld [vmem:[%s243] sm:$0xff]
        %v315 = vld [vmem:[%s243 + $0x8] sm:$0xff]
        %v316 = vld [vmem:[%s243 + $0x10] sm:$0xff]
        %v317 = vld [vmem:[%s243 + $0x18] sm:$0xff]
        %v318 = vld [vmem:[%s243 + $0x20] sm:$0xff]
        %v319 = vld [vmem:[%s243 + $0x28] sm:$0xff]
        %v320 = vld [vmem:[%s243 + $0x30] sm:$0xff]
        %v321 = vld [vmem:[%s243 + $0x38] sm:$0xff]
        %v322 = vld [vmem:[%s2] sm:$0xff]
        %v323 = vld [vmem:[%s2 + $0x8] sm:$0xff]
        %v324 = vld [vmem:[%s2 + $0x10] sm:$0xff]
        %v325 = vld [vmem:[%s2 + $0x18] sm:$0xff]
        %327 = vset.pattern.permute.xlu0 0
        %328 = vperm.xlu0 %327, %v322
        %v329 = vpop.permute.xlu0 %328
        %332 = vset.pattern.permute.xlu0 0
        %333 = vperm.xlu0 %332, %v323
        %v334 = vpop.permute.xlu0 %333
        %337 = vset.pattern.permute.xlu0 0
        %338 = vperm.xlu0 %337, %v324
        %v339 = vpop.permute.xlu0 %338
        %342 = vset.pattern.permute.xlu0 0
        %343 = vperm.xlu0 %342, %v325
        %v344 = vpop.permute.xlu0 %343
        %vm346 = vcmask 261120
        %v348 = vsel %vm346, %v310, 0
        %v351 = vsel %vm346, %v311, 0
        %v354 = vsel %vm346, %v312, 0
        %v357 = vsel %vm346, %v313, 0
        %v359 = vand.u32 %v315, 4294901760
        %360 = vmatprep.subr.mxu0 %v359
        %v361 = vand.u32 %v314, 4294901760
        %362 = vmatpush1.msra.mxu0 %v361
        %v363 = vand.u32 %v317, 4294901760
        %364 = vmatprep.subr.mxu0 %v363
        %v365 = vand.u32 %v316, 4294901760
        %366 = vmatpush1.msra.mxu0 %v365
        %v367 = vand.u32 %v319, 4294901760
        %368 = vmatprep.subr.mxu0 %v367
        %v369 = vand.u32 %v318, 4294901760
        %370 = vmatpush1.msra.mxu0 %v369
        %v371 = vand.u32 %v321, 4294901760
        %372 = vmatprep.subr.mxu0 %v371
        %v373 = vand.u32 %v320, 4294901760
        %374 = vmatpush1.msra.mxu0 %v373
        %375 = vmatprep.subr.mxu0 0.0
        %376 = vmatpush1.msra.mxu0 0.0
        %377 = vmatprep.subr.mxu0 0.0
        %378 = vmatpush1.msra.mxu0 0.0
        %379 = vmatprep.subr.mxu0 0.0
        %380 = vmatpush1.msra.mxu0 0.0
        %381 = vmatprep.subr.mxu0 0.0
        %382 = vmatpush1.msra.mxu0 0.0
        %383 = vmatprep.subr.mxu0 0.0
        %384 = vmatpush1.msra.mxu0 0.0
        %385 = vmatprep.subr.mxu0 0.0
        %386 = vmatpush1.msra.mxu0 0.0
        %387 = vmatprep.subr.mxu0 0.0
        %388 = vmatpush1.msra.mxu0 0.0
        %389 = vmatprep.subr.mxu0 0.0
        %390 = vmatpush1.msra.mxu0 0.0
        %391 = vmatprep.subr.mxu0 0.0
        %392 = vmatpush1.msra.mxu0 0.0
        %393 = vmatprep.subr.mxu0 0.0
        %394 = vmatpush1.msra.mxu0 0.0
        %395 = vmatprep.subr.mxu0 0.0
        %396 = vmatpush1.msra.mxu0 0.0
        %397 = vmatprep.subr.mxu0 0.0
        %398 = vmatpush1.msra.mxu0 0.0
        %399 = vmatprep.subr.mxu0 0.0
        %400 = vmatpush1.msra.mxu0 0.0
        %401 = vmatprep.subr.mxu0 0.0
        %402 = vmatpush1.msra.mxu0 0.0
        %403 = vmatprep.subr.mxu0 0.0
        %404 = vmatpush1.msra.mxu0 0.0
        %405 = vmatprep.subr.mxu0 0.0
        %406 = vmatpush1.msra.mxu0 0.0
        %407 = vmatprep.subr.mxu0 0.0
        %408 = vmatpush1.msra.mxu0 0.0
        %409 = vmatprep.subr.mxu0 0.0
        %410 = vmatpush1.msra.mxu0 0.0
        %411 = vmatprep.subr.mxu0 0.0
        %412 = vmatpush1.msra.mxu0 0.0
        %413 = vmatprep.subr.mxu0 0.0
        %414 = vmatpush1.msra.mxu0 0.0
        %415 = vmatprep.subr.mxu0 0.0
        %416 = vmatpush1.msra.mxu0 0.0
        %417 = vmatprep.subr.mxu0 0.0
        %418 = vmatpush1.msra.mxu0 0.0
        %419 = vmatprep.subr.mxu0 0.0
        %420 = vmatpush1.msra.mxu0 0.0
        %421 = vmatprep.subr.mxu0 0.0
        %422 = vmatpush1.msra.mxu0 0.0
        %423 = vmatprep.subr.mxu0 0.0
        %424 = vmatpush1.msra.mxu0 0.0
        %425 = vmatprep.subr.mxu0 0.0
        %426 = vmatpush1.msra.mxu0 0.0
        %427 = vmatprep.subr.mxu0 0.0
        %428 = vmatpush1.msra.mxu0 0.0
        %429 = vmatprep.subr.mxu0 0.0
        %430 = vmatpush1.msra.mxu0 0.0
        %431 = vmatprep.mubr.f32.mxu0 0.0
        %v432 = vand.u32 %v348, 4294901760
        %v433 = vsub.f32 %v348, %v432
        %v434 = vand.u32 %v433, 4294901760
        %v435 = vsub.f32 %v433, %v434
        %v436 = vand.u32 %v435, 4294901760
        %437 = vmatmul.mubr.f32.gmra.mrb[0].mxu0 %v436
        %v438 = vpop.f32.mrb[0].mxu0
        %v439 = vadd.f32 %v329, %v438
        %v440 = vpop.f32.mrb[0].mxu0
        %v441 = vadd.f32 %v329, %v440
        %442 = vmatprep.mubr.f32.mxu0 0.0
        %v443 = vand.u32 %v351, 4294901760
        %v444 = vsub.f32 %v351, %v443
        %v445 = vand.u32 %v444, 4294901760
        %v446 = vsub.f32 %v444, %v445
        %v447 = vand.u32 %v446, 4294901760
        %448 = vmatmul.mubr.f32.gmra.mrb[0].mxu0 %v447
        %v449 = vpop.f32.mrb[0].mxu0
        %v450 = vadd.f32 %v334, %v449
        %v451 = vpop.f32.mrb[0].mxu0
        %v452 = vadd.f32 %v334, %v451
        %453 = vmatprep.mubr.f32.mxu0 0.0
        %v454 = vand.u32 %v354, 4294901760
        %v455 = vsub.f32 %v354, %v454
        %v456 = vand.u32 %v455, 4294901760
        %v457 = vsub.f32 %v455, %v456
        %v458 = vand.u32 %v457, 4294901760
        %459 = vmatmul.mubr.f32.gmra.mrb[0].mxu0 %v458
        %v460 = vpop.f32.mrb[0].mxu0
        %v461 = vadd.f32 %v339, %v460
        %v462 = vpop.f32.mrb[0].mxu0
        %v463 = vadd.f32 %v339, %v462
        %464 = vmatprep.mubr.f32.mxu0 0.0
        %v465 = vand.u32 %v357, 4294901760
        %v466 = vsub.f32 %v357, %v465
        %v467 = vand.u32 %v466, 4294901760
        %v468 = vsub.f32 %v466, %v467
        %v469 = vand.u32 %v468, 4294901760
        %470 = vmatmul.mubr.f32.gmra.mrb[0].mxu0 %v469
        %v471 = vpop.f32.mrb[0].mxu0
        %v472 = vadd.f32 %v344, %v471
        %v473 = vpop.f32.mrb[0].mxu0
        %v474 = vadd.f32 %v344, %v473
        %475 = vdwg.mxu0
        %v476 = vand.u32 %v315, 4294901760
        %v477 = vsub.f32 %v315, %v476
        %v478 = vand.u32 %v477, 4294901760
        %v479 = vsub.f32 %v477, %v478
        %v480 = vand.u32 %v479, 4294901760
        %481 = vmatprep.subr.mxu0 %v480
        %v482 = vand.u32 %v314, 4294901760
        %v483 = vsub.f32 %v314, %v482
        %v484 = vand.u32 %v483, 4294901760
        %v485 = vsub.f32 %v483, %v484
        %v486 = vand.u32 %v485, 4294901760
        %487 = vmatpush1.msra.mxu0 %v486
        %v488 = vand.u32 %v317, 4294901760
        %v489 = vsub.f32 %v317, %v488
        %v490 = vand.u32 %v489, 4294901760
        %v491 = vsub.f32 %v489, %v490
        %v492 = vand.u32 %v491, 4294901760
        %493 = vmatprep.subr.mxu0 %v492
        %v494 = vand.u32 %v316, 4294901760
        %v495 = vsub.f32 %v316, %v494
        %v496 = vand.u32 %v495, 4294901760
        %v497 = vsub.f32 %v495, %v496
        %v498 = vand.u32 %v497, 4294901760
        %499 = vmatpush1.msra.mxu0 %v498
        %v500 = vand.u32 %v319, 4294901760
        %v501 = vsub.f32 %v319, %v500
        %v502 = vand.u32 %v501, 4294901760
        %v503 = vsub.f32 %v501, %v502
        %v504 = vand.u32 %v503, 4294901760
        %505 = vmatprep.subr.mxu0 %v504
        %v506 = vand.u32 %v318, 4294901760
        %v507 = vsub.f32 %v318, %v506
        %v508 = vand.u32 %v507, 4294901760
        %v509 = vsub.f32 %v507, %v508
        %v510 = vand.u32 %v509, 4294901760
        %511 = vmatpush1.msra.mxu0 %v510
        %v512 = vand.u32 %v321, 4294901760
        %v513 = vsub.f32 %v321, %v512
        %v514 = vand.u32 %v513, 4294901760
        %v515 = vsub.f32 %v513, %v514
        %v516 = vand.u32 %v515, 4294901760
        %517 = vmatprep.subr.mxu0 %v516
        %v518 = vand.u32 %v320, 4294901760
        %v519 = vsub.f32 %v320, %v518
        %v520 = vand.u32 %v519, 4294901760
        %v521 = vsub.f32 %v519, %v520
        %v522 = vand.u32 %v521, 4294901760
        %523 = vmatpush1.msra.mxu0 %v522
        %524 = vmatprep.subr.mxu0 0.0
        %525 = vmatpush1.msra.mxu0 0.0
        %526 = vmatprep.subr.mxu0 0.0
        %527 = vmatpush1.msra.mxu0 0.0
        %528 = vmatprep.subr.mxu0 0.0
        %529 = vmatpush1.msra.mxu0 0.0
        %530 = vmatprep.subr.mxu0 0.0
        %531 = vmatpush1.msra.mxu0 0.0
        %532 = vmatprep.subr.mxu0 0.0
        %533 = vmatpush1.msra.mxu0 0.0
        %534 = vmatprep.subr.mxu0 0.0
        %535 = vmatpush1.msra.mxu0 0.0
        %536 = vmatprep.subr.mxu0 0.0
        %537 = vmatpush1.msra.mxu0 0.0
        %538 = vmatprep.subr.mxu0 0.0
        %539 = vmatpush1.msra.mxu0 0.0
        %540 = vmatprep.subr.mxu0 0.0
        %541 = vmatpush1.msra.mxu0 0.0
        %542 = vmatprep.subr.mxu0 0.0
        %543 = vmatpush1.msra.mxu0 0.0
        %544 = vmatprep.subr.mxu0 0.0
        %545 = vmatpush1.msra.mxu0 0.0
        %546 = vmatprep.subr.mxu0 0.0
        %547 = vmatpush1.msra.mxu0 0.0
        %548 = vmatprep.subr.mxu0 0.0
        %549 = vmatpush1.msra.mxu0 0.0
        %550 = vmatprep.subr.mxu0 0.0
        %551 = vmatpush1.msra.mxu0 0.0
        %552 = vmatprep.subr.mxu0 0.0
        %553 = vmatpush1.msra.mxu0 0.0
        %554 = vmatprep.subr.mxu0 0.0
        %555 = vmatpush1.msra.mxu0 0.0
        %556 = vmatprep.subr.mxu0 0.0
        %557 = vmatpush1.msra.mxu0 0.0
        %558 = vmatprep.subr.mxu0 0.0
        %559 = vmatpush1.msra.mxu0 0.0
        %560 = vmatprep.subr.mxu0 0.0
        %561 = vmatpush1.msra.mxu0 0.0
        %562 = vmatprep.subr.mxu0 0.0
        %563 = vmatpush1.msra.mxu0 0.0
        %564 = vmatprep.subr.mxu0 0.0
        %565 = vmatpush1.msra.mxu0 0.0
        %566 = vmatprep.subr.mxu0 0.0
        %567 = vmatpush1.msra.mxu0 0.0
        %568 = vmatprep.subr.mxu0 0.0
        %569 = vmatpush1.msra.mxu0 0.0
        %570 = vmatprep.subr.mxu0 0.0
        %571 = vmatpush1.msra.mxu0 0.0
        %572 = vmatprep.subr.mxu0 0.0
        %573 = vmatpush1.msra.mxu0 0.0
        %574 = vmatprep.subr.mxu0 0.0
        %575 = vmatpush1.msra.mxu0 0.0
        %576 = vmatprep.subr.mxu0 0.0
        %577 = vmatpush1.msra.mxu0 0.0
        %578 = vmatprep.subr.mxu0 0.0
        %579 = vmatpush1.msra.mxu0 0.0
        %580 = vmatprep.mubr.f32.mxu0 0.0
        %v581 = vand.u32 %v348, 4294901760
        %582 = vmatmul.mubr.f32.gmra.mrb[0].mxu0 %v581
        %v583 = vpop.f32.mrb[0].mxu0
        %v584 = vadd.f32 %v439, %v583
        %v585 = vpop.f32.mrb[0].mxu0
        %v586 = vadd.f32 %v441, %v585
        %587 = vmatprep.mubr.f32.mxu0 0.0
        %v588 = vand.u32 %v351, 4294901760
        %589 = vmatmul.mubr.f32.gmra.mrb[0].mxu0 %v588
        %v590 = vpop.f32.mrb[0].mxu0
        %v591 = vadd.f32 %v450, %v590
        %v592 = vpop.f32.mrb[0].mxu0
        %v593 = vadd.f32 %v452, %v592
        %594 = vmatprep.mubr.f32.mxu0 0.0
        %v595 = vand.u32 %v354, 4294901760
        %596 = vmatmul.mubr.f32.gmra.mrb[0].mxu0 %v595
        %v597 = vpop.f32.mrb[0].mxu0
        %v598 = vadd.f32 %v461, %v597
        %v599 = vpop.f32.mrb[0].mxu0
        %v600 = vadd.f32 %v463, %v599
        %601 = vmatprep.mubr.f32.mxu0 0.0
        %v602 = vand.u32 %v357, 4294901760
        %603 = vmatmul.mubr.f32.gmra.mrb[0].mxu0 %v602
        %v604 = vpop.f32.mrb[0].mxu0
        %v605 = vadd.f32 %v472, %v604
        %v606 = vpop.f32.mrb[0].mxu0
        %v607 = vadd.f32 %v474, %v606
        %608 = vdwg.mxu0
        %v609 = vand.u32 %v315, 4294901760
        %v610 = vsub.f32 %v315, %v609
        %611 = vmatprep.subr.mxu0 %v610
        %v612 = vand.u32 %v314, 4294901760
        %v613 = vsub.f32 %v314, %v612
        %614 = vmatpush1.msra.mxu0 %v613
        %v615 = vand.u32 %v317, 4294901760
        %v616 = vsub.f32 %v317, %v615
        %617 = vmatprep.subr.mxu0 %v616
        %v618 = vand.u32 %v316, 4294901760
        %v619 = vsub.f32 %v316, %v618
        %620 = vmatpush1.msra.mxu0 %v619
        %v621 = vand.u32 %v319, 4294901760
        %v622 = vsub.f32 %v319, %v621
        %623 = vmatprep.subr.mxu0 %v622
        %v624 = vand.u32 %v318, 4294901760
        %v625 = vsub.f32 %v318, %v624
        %626 = vmatpush1.msra.mxu0 %v625
        %v627 = vand.u32 %v321, 4294901760
        %v628 = vsub.f32 %v321, %v627
        %629 = vmatprep.subr.mxu0 %v628
        %v630 = vand.u32 %v320, 4294901760
        %v631 = vsub.f32 %v320, %v630
        %632 = vmatpush1.msra.mxu0 %v631
        %633 = vmatprep.subr.mxu0 0.0
        %634 = vmatpush1.msra.mxu0 0.0
        %635 = vmatprep.subr.mxu0 0.0
        %636 = vmatpush1.msra.mxu0 0.0
        %637 = vmatprep.subr.mxu0 0.0
        %638 = vmatpush1.msra.mxu0 0.0
        %639 = vmatprep.subr.mxu0 0.0
        %640 = vmatpush1.msra.mxu0 0.0
        %641 = vmatprep.subr.mxu0 0.0
        %642 = vmatpush1.msra.mxu0 0.0
        %643 = vmatprep.subr.mxu0 0.0
        %644 = vmatpush1.msra.mxu0 0.0
        %645 = vmatprep.subr.mxu0 0.0
        %646 = vmatpush1.msra.mxu0 0.0
        %647 = vmatprep.subr.mxu0 0.0
        %648 = vmatpush1.msra.mxu0 0.0
        %649 = vmatprep.subr.mxu0 0.0
        %650 = vmatpush1.msra.mxu0 0.0
        %651 = vmatprep.subr.mxu0 0.0
        %652 = vmatpush1.msra.mxu0 0.0
        %653 = vmatprep.subr.mxu0 0.0
        %654 = vmatpush1.msra.mxu0 0.0
        %655 = vmatprep.subr.mxu0 0.0
        %656 = vmatpush1.msra.mxu0 0.0
        %657 = vmatprep.subr.mxu0 0.0
        %658 = vmatpush1.msra.mxu0 0.0
        %659 = vmatprep.subr.mxu0 0.0
        %660 = vmatpush1.msra.mxu0 0.0
        %661 = vmatprep.subr.mxu0 0.0
        %662 = vmatpush1.msra.mxu0 0.0
        %663 = vmatprep.subr.mxu0 0.0
        %664 = vmatpush1.msra.mxu0 0.0
        %665 = vmatprep.subr.mxu0 0.0
        %666 = vmatpush1.msra.mxu0 0.0
        %667 = vmatprep.subr.mxu0 0.0
        %668 = vmatpush1.msra.mxu0 0.0
        %669 = vmatprep.subr.mxu0 0.0
        %670 = vmatpush1.msra.mxu0 0.0
        %671 = vmatprep.subr.mxu0 0.0
        %672 = vmatpush1.msra.mxu0 0.0
        %673 = vmatprep.subr.mxu0 0.0
        %674 = vmatpush1.msra.mxu0 0.0
        %675 = vmatprep.subr.mxu0 0.0
        %676 = vmatpush1.msra.mxu0 0.0
        %677 = vmatprep.subr.mxu0 0.0
        %678 = vmatpush1.msra.mxu0 0.0
        %679 = vmatprep.subr.mxu0 0.0
        %680 = vmatpush1.msra.mxu0 0.0
        %681 = vmatprep.subr.mxu0 0.0
        %682 = vmatpush1.msra.mxu0 0.0
        %683 = vmatprep.subr.mxu0 0.0
        %684 = vmatpush1.msra.mxu0 0.0
        %685 = vmatprep.subr.mxu0 0.0
        %686 = vmatpush1.msra.mxu0 0.0
        %687 = vmatprep.subr.mxu0 0.0
        %688 = vmatpush1.msra.mxu0 0.0
        %689 = vmatprep.mubr.f32.mxu0 0.0
        %v690 = vand.u32 %v348, 4294901760
        %v691 = vsub.f32 %v348, %v690
        %692 = vmatmul.mubr.f32.gmra.mrb[0].mxu0 %v691
        %v693 = vpop.f32.mrb[0].mxu0
        %v694 = vadd.f32 %v584, %v693
        %v695 = vpop.f32.mrb[0].mxu0
        %v696 = vadd.f32 %v586, %v695
        %697 = vmatprep.mubr.f32.mxu0 0.0
        %v698 = vand.u32 %v351, 4294901760
        %v699 = vsub.f32 %v351, %v698
        %700 = vmatmul.mubr.f32.gmra.mrb[0].mxu0 %v699
        %v701 = vpop.f32.mrb[0].mxu0
        %v702 = vadd.f32 %v591, %v701
        %v703 = vpop.f32.mrb[0].mxu0
        %v704 = vadd.f32 %v593, %v703
        %705 = vmatprep.mubr.f32.mxu0 0.0
        %v706 = vand.u32 %v354, 4294901760
        %v707 = vsub.f32 %v354, %v706
        %708 = vmatmul.mubr.f32.gmra.mrb[0].mxu0 %v707
        %v709 = vpop.f32.mrb[0].mxu0
        %v710 = vadd.f32 %v598, %v709
        %v711 = vpop.f32.mrb[0].mxu0
        %v712 = vadd.f32 %v600, %v711
        %713 = vmatprep.mubr.f32.mxu0 0.0
        %v714 = vand.u32 %v357, 4294901760
        %v715 = vsub.f32 %v357, %v714
        %716 = vmatmul.mubr.f32.gmra.mrb[0].mxu0 %v715
        %v717 = vpop.f32.mrb[0].mxu0
        %v718 = vadd.f32 %v605, %v717
        %v719 = vpop.f32.mrb[0].mxu0
        %v720 = vadd.f32 %v607, %v719
        %721 = vdwg.mxu0
        %v722 = vand.u32 %v315, 4294901760
        %723 = vmatprep.subr.mxu0 %v722
        %v724 = vand.u32 %v314, 4294901760
        %725 = vmatpush1.msra.mxu0 %v724
        %v726 = vand.u32 %v317, 4294901760
        %727 = vmatprep.subr.mxu0 %v726
        %v728 = vand.u32 %v316, 4294901760
        %729 = vmatpush1.msra.mxu0 %v728
        %v730 = vand.u32 %v319, 4294901760
        %731 = vmatprep.subr.mxu0 %v730
        %v732 = vand.u32 %v318, 4294901760
        %733 = vmatpush1.msra.mxu0 %v732
        %v734 = vand.u32 %v321, 4294901760
        %735 = vmatprep.subr.mxu0 %v734
        %v736 = vand.u32 %v320, 4294901760
        %737 = vmatpush1.msra.mxu0 %v736
        %738 = vmatprep.subr.mxu0 0.0
        %739 = vmatpush1.msra.mxu0 0.0
        %740 = vmatprep.subr.mxu0 0.0
        %741 = vmatpush1.msra.mxu0 0.0
        %742 = vmatprep.subr.mxu0 0.0
        %743 = vmatpush1.msra.mxu0 0.0
        %744 = vmatprep.subr.mxu0 0.0
        %745 = vmatpush1.msra.mxu0 0.0
        %746 = vmatprep.subr.mxu0 0.0
        %747 = vmatpush1.msra.mxu0 0.0
        %748 = vmatprep.subr.mxu0 0.0
        %749 = vmatpush1.msra.mxu0 0.0
        %750 = vmatprep.subr.mxu0 0.0
        %751 = vmatpush1.msra.mxu0 0.0
        %752 = vmatprep.subr.mxu0 0.0
        %753 = vmatpush1.msra.mxu0 0.0
        %754 = vmatprep.subr.mxu0 0.0
        %755 = vmatpush1.msra.mxu0 0.0
        %756 = vmatprep.subr.mxu0 0.0
        %757 = vmatpush1.msra.mxu0 0.0
        %758 = vmatprep.subr.mxu0 0.0
        %759 = vmatpush1.msra.mxu0 0.0
        %760 = vmatprep.subr.mxu0 0.0
        %761 = vmatpush1.msra.mxu0 0.0
        %762 = vmatprep.subr.mxu0 0.0
        %763 = vmatpush1.msra.mxu0 0.0
        %764 = vmatprep.subr.mxu0 0.0
        %765 = vmatpush1.msra.mxu0 0.0
        %766 = vmatprep.subr.mxu0 0.0
        %767 = vmatpush1.msra.mxu0 0.0
        %768 = vmatprep.subr.mxu0 0.0
        %769 = vmatpush1.msra.mxu0 0.0
        %770 = vmatprep.subr.mxu0 0.0
        %771 = vmatpush1.msra.mxu0 0.0
        %772 = vmatprep.subr.mxu0 0.0
        %773 = vmatpush1.msra.mxu0 0.0
        %774 = vmatprep.subr.mxu0 0.0
        %775 = vmatpush1.msra.mxu0 0.0
        %776 = vmatprep.subr.mxu0 0.0
        %777 = vmatpush1.msra.mxu0 0.0
        %778 = vmatprep.subr.mxu0 0.0
        %779 = vmatpush1.msra.mxu0 0.0
        %780 = vmatprep.subr.mxu0 0.0
        %781 = vmatpush1.msra.mxu0 0.0
        %782 = vmatprep.subr.mxu0 0.0
        %783 = vmatpush1.msra.mxu0 0.0
        %784 = vmatprep.subr.mxu0 0.0
        %785 = vmatpush1.msra.mxu0 0.0
        %786 = vmatprep.subr.mxu0 0.0
        %787 = vmatpush1.msra.mxu0 0.0
        %788 = vmatprep.subr.mxu0 0.0
        %789 = vmatpush1.msra.mxu0 0.0
        %790 = vmatprep.subr.mxu0 0.0
        %791 = vmatpush1.msra.mxu0 0.0
        %792 = vmatprep.subr.mxu0 0.0
        %793 = vmatpush1.msra.mxu0 0.0
        %794 = vmatprep.mubr.f32.mxu0 0.0
        %v795 = vand.u32 %v348, 4294901760
        %v796 = vsub.f32 %v348, %v795
        %v797 = vand.u32 %v796, 4294901760
        %798 = vmatmul.mubr.f32.gmra.mrb[0].mxu0 %v797
        %v799 = vpop.f32.mrb[0].mxu0
        %v800 = vadd.f32 %v694, %v799
        %v801 = vpop.f32.mrb[0].mxu0
        %v802 = vadd.f32 %v696, %v801
        %803 = vmatprep.mubr.f32.mxu0 0.0
        %v804 = vand.u32 %v351, 4294901760
        %v805 = vsub.f32 %v351, %v804
        %v806 = vand.u32 %v805, 4294901760
        %807 = vmatmul.mubr.f32.gmra.mrb[0].mxu0 %v806
        %v808 = vpop.f32.mrb[0].mxu0
        %v809 = vadd.f32 %v702, %v808
        %v810 = vpop.f32.mrb[0].mxu0
        %v811 = vadd.f32 %v704, %v810
        %812 = vmatprep.mubr.f32.mxu0 0.0
        %v813 = vand.u32 %v354, 4294901760
        %v814 = vsub.f32 %v354, %v813
        %v815 = vand.u32 %v814, 4294901760
        %816 = vmatmul.mubr.f32.gmra.mrb[0].mxu0 %v815
        %v817 = vpop.f32.mrb[0].mxu0
        %v818 = vadd.f32 %v710, %v817
        %v819 = vpop.f32.mrb[0].mxu0
        %v820 = vadd.f32 %v712, %v819
        %821 = vmatprep.mubr.f32.mxu0 0.0
        %v822 = vand.u32 %v357, 4294901760
        %v823 = vsub.f32 %v357, %v822
        %v824 = vand.u32 %v823, 4294901760
        %825 = vmatmul.mubr.f32.gmra.mrb[0].mxu0 %v824
        %v826 = vpop.f32.mrb[0].mxu0
        %v827 = vadd.f32 %v718, %v826
        %v828 = vpop.f32.mrb[0].mxu0
        %v829 = vadd.f32 %v720, %v828
        %830 = vdwg.mxu0
        %v831 = vand.u32 %v315, 4294901760
        %v832 = vsub.f32 %v315, %v831
        %v833 = vand.u32 %v832, 4294901760
        %834 = vmatprep.subr.mxu0 %v833
        %v835 = vand.u32 %v314, 4294901760
        %v836 = vsub.f32 %v314, %v835
        %v837 = vand.u32 %v836, 4294901760
        %838 = vmatpush1.msra.mxu0 %v837
        %v839 = vand.u32 %v317, 4294901760
        %v840 = vsub.f32 %v317, %v839
        %v841 = vand.u32 %v840, 4294901760
        %842 = vmatprep.subr.mxu0 %v841
        %v843 = vand.u32 %v316, 4294901760
        %v844 = vsub.f32 %v316, %v843
        %v845 = vand.u32 %v844, 4294901760
        %846 = vmatpush1.msra.mxu0 %v845
        %v847 = vand.u32 %v319, 4294901760
        %v848 = vsub.f32 %v319, %v847
        %v849 = vand.u32 %v848, 4294901760
        %850 = vmatprep.subr.mxu0 %v849
        %v851 = vand.u32 %v318, 4294901760
        %v852 = vsub.f32 %v318, %v851
        %v853 = vand.u32 %v852, 4294901760
        %854 = vmatpush1.msra.mxu0 %v853
        %v855 = vand.u32 %v321, 4294901760
        %v856 = vsub.f32 %v321, %v855
        %v857 = vand.u32 %v856, 4294901760
        %858 = vmatprep.subr.mxu0 %v857
        %v859 = vand.u32 %v320, 4294901760
        %v860 = vsub.f32 %v320, %v859
        %v861 = vand.u32 %v860, 4294901760
        %862 = vmatpush1.msra.mxu0 %v861
        %863 = vmatprep.subr.mxu0 0.0
        %864 = vmatpush1.msra.mxu0 0.0
        %865 = vmatprep.subr.mxu0 0.0
        %866 = vmatpush1.msra.mxu0 0.0
        %867 = vmatprep.subr.mxu0 0.0
        %868 = vmatpush1.msra.mxu0 0.0
        %869 = vmatprep.subr.mxu0 0.0
        %870 = vmatpush1.msra.mxu0 0.0
        %871 = vmatprep.subr.mxu0 0.0
        %872 = vmatpush1.msra.mxu0 0.0
        %873 = vmatprep.subr.mxu0 0.0
        %874 = vmatpush1.msra.mxu0 0.0
        %875 = vmatprep.subr.mxu0 0.0
        %876 = vmatpush1.msra.mxu0 0.0
        %877 = vmatprep.subr.mxu0 0.0
        %878 = vmatpush1.msra.mxu0 0.0
        %879 = vmatprep.subr.mxu0 0.0
        %880 = vmatpush1.msra.mxu0 0.0
        %881 = vmatprep.subr.mxu0 0.0
        %882 = vmatpush1.msra.mxu0 0.0
        %883 = vmatprep.subr.mxu0 0.0
        %884 = vmatpush1.msra.mxu0 0.0
        %885 = vmatprep.subr.mxu0 0.0
        %886 = vmatpush1.msra.mxu0 0.0
        %887 = vmatprep.subr.mxu0 0.0
        %888 = vmatpush1.msra.mxu0 0.0
        %889 = vmatprep.subr.mxu0 0.0
        %890 = vmatpush1.msra.mxu0 0.0
        %891 = vmatprep.subr.mxu0 0.0
        %892 = vmatpush1.msra.mxu0 0.0
        %893 = vmatprep.subr.mxu0 0.0
        %894 = vmatpush1.msra.mxu0 0.0
        %895 = vmatprep.subr.mxu0 0.0
        %896 = vmatpush1.msra.mxu0 0.0
        %897 = vmatprep.subr.mxu0 0.0
        %898 = vmatpush1.msra.mxu0 0.0
        %899 = vmatprep.subr.mxu0 0.0
        %900 = vmatpush1.msra.mxu0 0.0
        %901 = vmatprep.subr.mxu0 0.0
        %902 = vmatpush1.msra.mxu0 0.0
        %903 = vmatprep.subr.mxu0 0.0
        %904 = vmatpush1.msra.mxu0 0.0
        %905 = vmatprep.subr.mxu0 0.0
        %906 = vmatpush1.msra.mxu0 0.0
        %907 = vmatprep.subr.mxu0 0.0
        %908 = vmatpush1.msra.mxu0 0.0
        %909 = vmatprep.subr.mxu0 0.0
        %910 = vmatpush1.msra.mxu0 0.0
        %911 = vmatprep.subr.mxu0 0.0
        %912 = vmatpush1.msra.mxu0 0.0
        %913 = vmatprep.subr.mxu0 0.0
        %914 = vmatpush1.msra.mxu0 0.0
        %915 = vmatprep.subr.mxu0 0.0
        %916 = vmatpush1.msra.mxu0 0.0
        %917 = vmatprep.subr.mxu0 0.0
        %918 = vmatpush1.msra.mxu0 0.0
        %919 = vmatprep.mubr.f32.mxu0 0.0
        %v920 = vand.u32 %v348, 4294901760
        %921 = vmatmul.mubr.f32.gmra.mrb[0].mxu0 %v920
        %v922 = vpop.f32.mrb[0].mxu0
        %v923 = vadd.f32 %v800, %v922
        %v924 = vpop.f32.mrb[0].mxu0
        %v925 = vadd.f32 %v802, %v924
        %926 = vmatprep.mubr.f32.mxu0 0.0
        %v927 = vand.u32 %v351, 4294901760
        %928 = vmatmul.mubr.f32.gmra.mrb[0].mxu0 %v927
        %v929 = vpop.f32.mrb[0].mxu0
        %v930 = vadd.f32 %v809, %v929
        %v931 = vpop.f32.mrb[0].mxu0
        %v932 = vadd.f32 %v811, %v931
        %933 = vmatprep.mubr.f32.mxu0 0.0
        %v934 = vand.u32 %v354, 4294901760
        %935 = vmatmul.mubr.f32.gmra.mrb[0].mxu0 %v934
        %v936 = vpop.f32.mrb[0].mxu0
        %v937 = vadd.f32 %v818, %v936
        %v938 = vpop.f32.mrb[0].mxu0
        %v939 = vadd.f32 %v820, %v938
        %940 = vmatprep.mubr.f32.mxu0 0.0
        %v941 = vand.u32 %v357, 4294901760
        %942 = vmatmul.mubr.f32.gmra.mrb[0].mxu0 %v941
        %v943 = vpop.f32.mrb[0].mxu0
        %v944 = vadd.f32 %v827, %v943
        %v945 = vpop.f32.mrb[0].mxu0
        %v946 = vadd.f32 %v829, %v945
        %947 = vdwg.mxu0
        %v948 = vand.u32 %v315, 4294901760
        %949 = vmatprep.subr.mxu0 %v948
        %v950 = vand.u32 %v314, 4294901760
        %951 = vmatpush1.msra.mxu0 %v950
        %v952 = vand.u32 %v317, 4294901760
        %953 = vmatprep.subr.mxu0 %v952
        %v954 = vand.u32 %v316, 4294901760
        %955 = vmatpush1.msra.mxu0 %v954
        %v956 = vand.u32 %v319, 4294901760
        %957 = vmatprep.subr.mxu0 %v956
        %v958 = vand.u32 %v318, 4294901760
        %959 = vmatpush1.msra.mxu0 %v958
        %v960 = vand.u32 %v321, 4294901760
        %961 = vmatprep.subr.mxu0 %v960
        %v962 = vand.u32 %v320, 4294901760
        %963 = vmatpush1.msra.mxu0 %v962
        %964 = vmatprep.subr.mxu0 0.0
        %965 = vmatpush1.msra.mxu0 0.0
        %966 = vmatprep.subr.mxu0 0.0
        %967 = vmatpush1.msra.mxu0 0.0
        %968 = vmatprep.subr.mxu0 0.0
        %969 = vmatpush1.msra.mxu0 0.0
        %970 = vmatprep.subr.mxu0 0.0
        %971 = vmatpush1.msra.mxu0 0.0
        %972 = vmatprep.subr.mxu0 0.0
        %973 = vmatpush1.msra.mxu0 0.0
        %974 = vmatprep.subr.mxu0 0.0
        %975 = vmatpush1.msra.mxu0 0.0
        %976 = vmatprep.subr.mxu0 0.0
        %977 = vmatpush1.msra.mxu0 0.0
        %978 = vmatprep.subr.mxu0 0.0
        %979 = vmatpush1.msra.mxu0 0.0
        %980 = vmatprep.subr.mxu0 0.0
        %981 = vmatpush1.msra.mxu0 0.0
        %982 = vmatprep.subr.mxu0 0.0
        %983 = vmatpush1.msra.mxu0 0.0
        %984 = vmatprep.subr.mxu0 0.0
        %985 = vmatpush1.msra.mxu0 0.0
        %986 = vmatprep.subr.mxu0 0.0
        %987 = vmatpush1.msra.mxu0 0.0
        %988 = vmatprep.subr.mxu0 0.0
        %989 = vmatpush1.msra.mxu0 0.0
        %990 = vmatprep.subr.mxu0 0.0
        %991 = vmatpush1.msra.mxu0 0.0
        %992 = vmatprep.subr.mxu0 0.0
        %993 = vmatpush1.msra.mxu0 0.0
        %994 = vmatprep.subr.mxu0 0.0
        %995 = vmatpush1.msra.mxu0 0.0
        %996 = vmatprep.subr.mxu0 0.0
        %997 = vmatpush1.msra.mxu0 0.0
        %998 = vmatprep.subr.mxu0 0.0
        %999 = vmatpush1.msra.mxu0 0.0
        %1000 = vmatprep.subr.mxu0 0.0
        %1001 = vmatpush1.msra.mxu0 0.0
        %1002 = vmatprep.subr.mxu0 0.0
        %1003 = vmatpush1.msra.mxu0 0.0
        %1004 = vmatprep.subr.mxu0 0.0
        %1005 = vmatpush1.msra.mxu0 0.0
        %1006 = vmatprep.subr.mxu0 0.0
        %1007 = vmatpush1.msra.mxu0 0.0
        %1008 = vmatprep.subr.mxu0 0.0
        %1009 = vmatpush1.msra.mxu0 0.0
        %1010 = vmatprep.subr.mxu0 0.0
        %1011 = vmatpush1.msra.mxu0 0.0
        %1012 = vmatprep.subr.mxu0 0.0
        %1013 = vmatpush1.msra.mxu0 0.0
        %1014 = vmatprep.subr.mxu0 0.0
        %1015 = vmatpush1.msra.mxu0 0.0
        %1016 = vmatprep.subr.mxu0 0.0
        %1017 = vmatpush1.msra.mxu0 0.0
        %1018 = vmatprep.subr.mxu0 0.0
        %1019 = vmatpush1.msra.mxu0 0.0
        %1020 = vmatprep.mubr.f32.mxu0 0.0
        %v1021 = vand.u32 %v348, 4294901760
        %1022 = vmatmul.mubr.f32.gmra.mrb[0].mxu0 %v1021
        %v1023 = vpop.f32.mrb[0].mxu0
        %v1024 = vadd.f32 %v923, %v1023
        %v1025 = vpop.f32.mrb[0].mxu0
        %v1026 = vadd.f32 %v925, %v1025
        %1027 = vmatprep.mubr.f32.mxu0 0.0
        %v1028 = vand.u32 %v351, 4294901760
        %1029 = vmatmul.mubr.f32.gmra.mrb[0].mxu0 %v1028
        %v1030 = vpop.f32.mrb[0].mxu0
        %v1031 = vadd.f32 %v930, %v1030
        %v1032 = vpop.f32.mrb[0].mxu0
        %v1033 = vadd.f32 %v932, %v1032
        %1034 = vmatprep.mubr.f32.mxu0 0.0
        %v1035 = vand.u32 %v354, 4294901760
        %1036 = vmatmul.mubr.f32.gmra.mrb[0].mxu0 %v1035
        %v1037 = vpop.f32.mrb[0].mxu0
        %v1038 = vadd.f32 %v937, %v1037
        %v1039 = vpop.f32.mrb[0].mxu0
        %v1040 = vadd.f32 %v939, %v1039
        %1041 = vmatprep.mubr.f32.mxu0 0.0
        %v1042 = vand.u32 %v357, 4294901760
        %1043 = vmatmul.mubr.f32.gmra.mrb[0].mxu0 %v1042
        %v1044 = vpop.f32.mrb[0].mxu0
        %v1045 = vadd.f32 %v944, %v1044
        %v1046 = vpop.f32.mrb[0].mxu0
        %v1047 = vadd.f32 %v946, %v1046
        %1048 = vdwg.mxu0
        %1049 = vst [vmem:[%s297] sm:$0x3f] %v1024
        %1050 = vst [vmem:[%s297 + $0x8] sm:$0x3f] %v1026
        %1051 = vst [vmem:[%s307] sm:$0xff] %v1031
        %1052 = vst [vmem:[%s307 + $0x8] sm:$0xff] %v1033
        %1053 = vst [vmem:[%s307 + $0x10] sm:$0x3f] %v1038
        %1054 = vst [vmem:[%s307 + $0x18] sm:$0x3f] %v1040
        %v1057 = vcombine.low %v1045, %v1047
        %1059 = vst [vmem:[%s287] sm:$0xff] %v1057
        %s1060 = smul.u32 2, %s28
        %p1061 = scmp.lt.s32.totalorder %s27, 1
        %s1062 = scalar_select %p1061, %s27, 1
        %p1063 = scmp.lt.s32.totalorder %s1060, 1
        %s1064 = scalar_select %p1063, %s1060, 1
        %s1065 = smul.addr %s1062, 2
        %s1066 = sadd.s32 %s1064, %s1065
        %s1067 = smul.addr %s1066, 8
        %s1068 = scalar_lea.vmem %s3, %s1067
        %s1069 = smul.u32 2, %s28
        %p1070 = scmp.lt.s32.totalorder %s27, 1
        %s1071 = scalar_select %p1070, %s27, 1
        %p1072 = scmp.lt.s32.totalorder %s1069, 1
        %s1073 = scalar_select %p1072, %s1069, 1
        %s1074 = smul.addr %s1071, 4
        %s1075 = sadd.s32 %s1073, %s1074
        %s1076 = smul.addr %s1075, 8
        %s1077 = scalar_lea.vmem %s4, %s1076
        %s1078 = sand.u32 %s171, 1
        %s1079 = scalar_lea.sflag [#allocation4], %s1078
        %s1080 = sand.u32 %s171, 1
        %s1081 = smul.addr %s1080, 8
        %s1082 = scalar_lea.vmem [#allocation5], %s1081
        // Predicated region
        $region37: #{tpu_custom_call.1} parent=31 // pred_check
          %p1083 = pneg %p125
        $region38: #{tpu_custom_call.1} parent=31 // pred_check_branch
          %1085 = sbr.rel (%p1083) target = $region40
        $region39: #{tpu_custom_call.1} parent=31 // pred_region
          %s1086 = smul.u32 2, %s28
        $region40: #{tpu_custom_call.1} parent=31 // pred_fallthru
          _
        // Predicated region
        $region41: #{tpu_custom_call.1} parent=31 // pred_check
          %p1087 = pneg %p153
        $region42: #{tpu_custom_call.1} parent=31 // pred_check_branch
          %1089 = sbr.rel (%p1087) target = $region44
        $region43: #{tpu_custom_call.1} parent=31 // pred_region
          %s1090 = smul.u32 2, %s28
        $region44: #{tpu_custom_call.1} parent=31 // pred_fallthru
          _
        // Predicated region
        $region45: #{tpu_custom_call.1} parent=31 // pred_check
          %p1091 = pneg %p181
        $region46: #{tpu_custom_call.1} parent=31 // pred_check_branch
          %1093 = sbr.rel (%p1091) target = $region48
        $region47: #{tpu_custom_call.1} parent=31 // pred_region
          %s1094 = smul.u32 2, %s28
          %s1096 = ssub.s32 128, 128
          %1097 = vsyncadd %s1079, %s1096
          %s1098 = smul.addr %s27, 2
          %s1099 = sadd.s32 %s1094, %s1098
          %s1100 = smul.addr %s1099, 64
          %s1101 = scalar_lea.hbm %s5, %s1100
          %s1103 = sshll.u32 %s1082, 4
          %s1104 = int_to_ptr.vmem [resolvable:$true] %s1103
          %1106 = dma.vmem_to_hbm [thread:$0]  %s1104, 128, %s1101, %s1079
        $region48: #{tpu_custom_call.1} parent=31 // pred_fallthru
          _
      $region32: #{tpu_custom_call.1} parent=5 // pred_fallthru
        _
      %p1107 = scmp.le.s32.totalorder 2, %s18
      // Predicated region
      $region49: #{tpu_custom_call.1} parent=5 // pred_check
        %p1108 = pneg %p1107
      $region50: #{tpu_custom_call.1} parent=5 // pred_check_branch
        %1110 = sbr.rel (%p1108) target = $region52
      $region51: #{tpu_custom_call.1} parent=5 // pred_region
        %s1111 = ssub.s32 %s18, 2
        // Predicated region
        $region53: #{tpu_custom_call.1} parent=51 // pred_check
          %p1112 = pneg %p131
        $region54: #{tpu_custom_call.1} parent=51 // pred_check_branch
          %1114 = sbr.rel (%p1112) target = $region56
        $region55: #{tpu_custom_call.1} parent=51 // pred_region
          %s1115 = smul.u32 2, %s30
          %p1116 = scmp.lt.s32.totalorder %s29, 1
          %s1117 = scalar_select %p1116, %s29, 1
          %p1118 = scmp.lt.s32.totalorder %s1115, 1
          %s1119 = scalar_select %p1118, %s1115, 1
          %s1120 = smul.addr %s1117, 2
          %s1121 = sadd.s32 %s1119, %s1120
          %s1122 = smul.addr %s1121, 8
          %s1123 = scalar_lea.vmem %s3, %s1122
        $region56: #{tpu_custom_call.1} parent=51 // pred_fallthru
          _
        // Predicated region
        $region57: #{tpu_custom_call.1} parent=51 // pred_check
          %p1124 = pneg %p159
        $region58: #{tpu_custom_call.1} parent=51 // pred_check_branch
          %1126 = sbr.rel (%p1124) target = $region60
        $region59: #{tpu_custom_call.1} parent=51 // pred_region
          %s1127 = smul.u32 2, %s30
          %p1128 = scmp.lt.s32.totalorder %s29, 1
          %s1129 = scalar_select %p1128, %s29, 1
          %p1130 = scmp.lt.s32.totalorder %s1127, 1
          %s1131 = scalar_select %p1130, %s1127, 1
          %s1132 = smul.addr %s1129, 4
          %s1133 = sadd.s32 %s1131, %s1132
          %s1134 = smul.addr %s1133, 8
          %s1135 = scalar_lea.vmem %s4, %s1134
        $region60: #{tpu_custom_call.1} parent=51 // pred_fallthru
          _
        // Predicated region
        $region61: #{tpu_custom_call.1} parent=51 // pred_check
          %p1136 = pneg %p187
        $region62: #{tpu_custom_call.1} parent=51 // pred_check_branch
          %1138 = sbr.rel (%p1136) target = $region64
        $region63: #{tpu_custom_call.1} parent=51 // pred_region
          %s1139 = sand.u32 %s172, 1
          %s1140 = scalar_lea.sflag [#allocation4], %s1139
          %s1141 = sand.u32 %s172, 1
          %s1142 = smul.addr %s1141, 8
          %s1143 = scalar_lea.vmem [#allocation5], %s1142
          %1144 = dma.done %s1140, 128
        $region64: #{tpu_custom_call.1} parent=51 // pred_fallthru
          _
      $region52: #{tpu_custom_call.1} parent=5 // pred_fallthru
        _
    $region6: #{tpu_custom_call.1} parent=1 // loop_footer
      %s22 = sadd.s32 1, %s18
    $region7: #{tpu_custom_call.1} parent=1 // loop_footer_branch
      %17 = sbr.rel target = $region3
    $region8: #{tpu_custom_call.1} parent=1 // loop_exit
      _
    %1145 = vsyncpa [#allocation3], 1
    %s1146 = scalar_lea.sflag [#allocation3], 1
    %1147 = vsyncpa %s1146, 1
    %1148 = vsyncpa [#allocation4], 1
    %s1149 = scalar_lea.sflag [#allocation4], 1
    %1150 = vsyncpa %s1149, 1

</llo_original>
